<compile_context>
chip_gen: v7x
topology: tpu7x:2x2x1
jax: 0.10.0
libtpu: 0.0.40
codegen_flags: <defaults>
</compile_context>

<pallas_src>
import functools

import jax
import jax.numpy as jnp
from jax import lax
from jax.experimental import pallas as pl
from jax.experimental.pallas import tpu as pltpu


def _round_up(x: int, m: int) -> int:
    return (x + m - 1) // m * m


def actor_kernel(x_ref, w1_ref, b1_ref, w2_ref, b2_ref, wh_ref, bh_ref,
                 out_ref, *, action_dim: int):
    # fc1 + ReLU  (bf16 operands on the MXU, f32 accumulate / elementwise)
    x = x_ref[...].astype(jnp.bfloat16)
    h1 = jnp.dot(x, w1_ref[...], preferred_element_type=jnp.float32) + b1_ref[...]
    h1 = jnp.maximum(h1, 0.0)

    # fc2 + ReLU
    h2 = jnp.dot(h1.astype(jnp.bfloat16), w2_ref[...],
                 preferred_element_type=jnp.float32) + b2_ref[...]
    h2 = jnp.maximum(h2, 0.0)

    # fused heads: lanes [0, A) = mu, lanes [A, 2A) = log_std.  std via EUP exp.
    head = jnp.dot(h2.astype(jnp.bfloat16), wh_ref[...],
                   preferred_element_type=jnp.float32) + bh_ref[...]
    std = jnp.exp(jnp.clip(head, -20.0, 2.0))
    lane = lax.broadcasted_iota(jnp.int32, head.shape, 1)
    out_ref[...] = jnp.where(lane >= action_dim, std, head).astype(out_ref.dtype)


def prepare_params(params, *, lane: int = 128):
    """One-time host-side weight prep (call once, outside the hot loop):
      - fuse mu / log_std heads into a single (H, 2A) weight / (1, 2A) bias,
      - zero-pad hidden_dim to a lane-dense multiple of 128 (exact math),
      - cast MXU weight operands to bf16 (biases stay f32).
    """
    w1, b1, w2, b2, wmu, bmu, wls, bls = params
    state_dim, hidden_dim = w1.shape
    action_dim = wmu.shape[1]

    hp = _round_up(hidden_dim, lane)
    pad = hp - hidden_dim
    if pad:
        w1 = jnp.pad(w1, ((0, 0), (0, pad)))
        b1 = jnp.pad(b1, ((0, 0), (0, pad)))
        w2 = jnp.pad(w2, ((0, pad), (0, pad)))
        b2 = jnp.pad(b2, ((0, 0), (0, pad)))
        wmu = jnp.pad(wmu, ((0, pad), (0, 0)))
        wls = jnp.pad(wls, ((0, pad), (0, 0)))

    w_head = jnp.concatenate([wmu, wls], axis=1)   # (Hp, 2A)
    b_head = jnp.concatenate([bmu, bls], axis=1)   # (1, 2A)

    # NOTE: bf16 weight casts also apply to the log_std head; the ~0.4% relative
    # error is exponentiated into std.  Keep weights f32 here if exact parity
    # with an f32 PyTorch Actor is required.
    return dict(
        w1=w1.astype(jnp.bfloat16), b1=b1,
        w2=w2.astype(jnp.bfloat16), b2=b2,
        wh=w_head.astype(jnp.bfloat16), bh=b_head,
        state_dim=state_dim, hidden_dim=hidden_dim, action_dim=action_dim,
    )


def _const_spec(arr):
    # Same block every grid step -> stays VMEM-resident across the batch loop.
    # (At large hidden sizes consider pipeline_mode=pl.Buffered(1) to drop the
    #  unused second pipeline buffer per weight.)
    return pl.BlockSpec(arr.shape, lambda i: (0,) * arr.ndim)


def actor_forward(state, prepared, *, batch_tile: int = 512):
    """state: (B, state_dim) f32.  Returns (mu, std), each (B, action_dim)."""
    B, state_dim = state.shape
    assert state_dim == prepared["state_dim"]
    A = prepared["action_dim"]
    w1, b1 = prepared["w1"], prepared["b1"]
    w2, b2 = prepared["w2"], prepared["b2"]
    wh, bh = prepared["wh"], prepared["bh"]
    hp = w1.shape[1]

    # Batch tile: always a multiple of 8; when B > batch_tile clamp so the grid
    # has >= 2 steps (lets the "parallel" axis shard across v7x's 2 TCs).
    if B > batch_tile:
        TB = min(_round_up(batch_tile, 8), _round_up(pl.cdiv(B, 2), 8))
    else:
        TB = _round_up(B, 8)
    TB = max(8, TB)
    grid = (pl.cdiv(B, TB),)   # partial last block handled by Pallas (no host pad)

    out_w = 2 * A
    flops = 2 * B * (state_dim * hp + hp * hp + hp * out_w)
    bytes_accessed = (state.size * 4
                      + (w1.size + w2.size + wh.size) * 2
                      + (b1.size + b2.size + bh.size) * 4
                      + B * out_w * 4)

    out = pl.pallas_call(
        functools.partial(actor_kernel, action_dim=A),
        out_shape=jax.ShapeDtypeStruct((B, out_w), jnp.float32),
        grid=grid,
        in_specs=[
            pl.BlockSpec((TB, state_dim), lambda i: (i, 0)),   # batch-tiled
            _const_spec(w1), _const_spec(b1),                  # VMEM-resident
            _const_spec(w2), _const_spec(b2),
            _const_spec(wh), _const_spec(bh),
        ],
        out_specs=pl.BlockSpec((TB, out_w), lambda i: (i, 0)),
        compiler_params=pltpu.CompilerParams(
            dimension_semantics=("parallel",),     # shards batch across TCs on v7x
            vmem_limit_bytes=32 * 1024 * 1024,     # valid on v5e/v6e/v7x
        ),
        cost_estimate=pl.CostEstimate(
            flops=flops,
            transcendentals=B * out_w,
            bytes_accessed=bytes_accessed),
    )(state, w1, b1, w2, b2, wh, bh)

    return out[:, :A], out[:, A:]


def init_params(key, state_dim, action_dim, hidden_dim):
    """Deterministic synthetic parameters. Weights are (in, out); biases (1, out)."""
    ks = jax.random.split(key, 8)

    def lin(kw, kb, fan_in, fan_out):
        bound = 1.0 / jnp.sqrt(fan_in)
        w = jax.random.uniform(kw, (fan_in, fan_out), jnp.float32, -bound, bound)
        b = jax.random.uniform(kb, (1, fan_out), jnp.float32, -bound, bound)
        return w, b

    w1, b1 = lin(ks[0], ks[1], state_dim, hidden_dim)
    w2, b2 = lin(ks[2], ks[3], hidden_dim, hidden_dim)
    wmu, bmu = lin(ks[4], ks[5], hidden_dim, action_dim)
    wls, bls = lin(ks[6], ks[7], hidden_dim, action_dim)
    return (w1, b1, w2, b2, wmu, bmu, wls, bls)


def actor_forward_ref(state, params, *, bf16: bool = True):
    """Pure-JAX reference matching the kernel's bf16-operand / f32-accumulate math."""
    w1, b1, w2, b2, wmu, bmu, wls, bls = params
    cast = (lambda a: a.astype(jnp.bfloat16)) if bf16 else (lambda a: a)
    dot = lambda a, w: jnp.dot(cast(a), cast(w), preferred_element_type=jnp.float32)
    h1 = jnp.maximum(dot(state, w1) + b1, 0.0)
    h2 = jnp.maximum(dot(h1, w2) + b2, 0.0)
    mu = dot(h2, wmu) + bmu
    log_std = jnp.clip(dot(h2, wls) + bls, -20.0, 2.0)
    return mu, jnp.exp(log_std)


if __name__ == "__main__":
    # TODO(synk): Actor.sample (Normal rsample / log_prob / tanh squash) is not
    # part of forward() and is left to the surrounding JAX code.
    state_dim, action_dim, hidden_dim = 8, 4, 32
    batch = 2

    key = jax.random.PRNGKey(0)
    kp, kx = jax.random.split(key)
    params = init_params(kp, state_dim, action_dim, hidden_dim)
    state = jax.random.normal(kx, (batch, state_dim), jnp.float32)

    prepared = prepare_params(params)          # one-time prep, outside hot loop
    mu, std = actor_forward(state, prepared)
    jax.block_until_ready((mu, std))

    mu_ref, std_ref = actor_forward_ref(state, params, bf16=True)
    assert mu.shape == (batch, action_dim) and std.shape == (batch, action_dim)
    assert jnp.allclose(mu, mu_ref, atol=1e-2, rtol=1e-2)
    assert jnp.allclose(std, std_ref, atol=1e-2, rtol=1e-2)
    assert bool(jnp.all(std > 0.0))

    print("KERNEL_OK")
</pallas_src>

<mosaic_0001>
module attributes {stable_mosaic.version = 11 : i64} {
  func.func @actor_kernel(%arg0: i32, %arg1: memref<8x8xf32, #tpu.memory_space<vmem>>, %arg2: memref<8x128xbf16, #tpu.memory_space<vmem>>, %arg3: memref<1x128xf32, #tpu.memory_space<vmem>>, %arg4: memref<128x128xbf16, #tpu.memory_space<vmem>>, %arg5: memref<1x128xf32, #tpu.memory_space<vmem>>, %arg6: memref<128x8xbf16, #tpu.memory_space<vmem>>, %arg7: memref<1x8xf32, #tpu.memory_space<vmem>>, %arg8: memref<8x8xf32, #tpu.memory_space<vmem>>) attributes {dimension_semantics = [#tpu.dimension_semantics<parallel>], iteration_bounds = array<i64: 1>, scalar_prefetch = 0 : i64, scratch_operands = 0 : i64, tpu.core_type = #tpu.core_type<tc>, window_params = [{transform_indices = @transform_0, window_bounds = array<i64: 8, 8>}, {pipeline_mode = #tpu.pipeline_mode<synchronous>, transform_indices = @transform_1, window_bounds = array<i64: 8, 128>}, {pipeline_mode = #tpu.pipeline_mode<synchronous>, transform_indices = @transform_2, window_bounds = array<i64: 1, 128>}, {pipeline_mode = #tpu.pipeline_mode<synchronous>, transform_indices = @transform_3, window_bounds = array<i64: 128, 128>}, {pipeline_mode = #tpu.pipeline_mode<synchronous>, transform_indices = @transform_4, window_bounds = array<i64: 1, 128>}, {pipeline_mode = #tpu.pipeline_mode<synchronous>, transform_indices = @transform_5, window_bounds = array<i64: 128, 8>}, {pipeline_mode = #tpu.pipeline_mode<synchronous>, transform_indices = @transform_6, window_bounds = array<i64: 1, 8>}, {transform_indices = @transform_7, window_bounds = array<i64: 8, 8>}]} {
    %c0 = arith.constant 0 : index
    %c0_0 = arith.constant 0 : index
    %0 = vector.load %arg1[%c0, %c0_0] : memref<8x8xf32, #tpu.memory_space<vmem>>, vector<8x8xf32>
    %1 = arith.truncf %0 : vector<8x8xf32> to vector<8x8xbf16>
    %c0_1 = arith.constant 0 : index
    %c0_2 = arith.constant 0 : index
    %2 = vector.load %arg2[%c0_1, %c0_2] : memref<8x128xbf16, #tpu.memory_space<vmem>>, vector<8x128xbf16>
    %cst = arith.constant dense<0.000000e+00> : vector<8x128xf32>
    %3 = tpu.matmul %1, %2, %cst {dimension_numbers = #tpu.dot_dimension_numbers<[1], [0], [0], [1], [0, 0, 1, 1], [], []>} : vector<8x8xbf16>, vector<8x128xbf16>, vector<8x128xf32> -> vector<8x128xf32>
    %c0_3 = arith.constant 0 : index
    %c0_4 = arith.constant 0 : index
    %4 = vector.load %arg3[%c0_3, %c0_4] : memref<1x128xf32, #tpu.memory_space<vmem>>, vector<1x128xf32>
    %5 = vector.broadcast %4 : vector<1x128xf32> to vector<8x128xf32>
    %6 = arith.addf %3, %5 : vector<8x128xf32>
    %cst_5 = arith.constant 0.000000e+00 : f32
    %7 = vector.broadcast %cst_5 : f32 to vector<8x128xf32>
    %8 = arith.maximumf %6, %7 : vector<8x128xf32>
    %9 = arith.truncf %8 : vector<8x128xf32> to vector<8x128xbf16>
    %c0_6 = arith.constant 0 : index
    %c0_7 = arith.constant 0 : index
    %10 = vector.load %arg4[%c0_6, %c0_7] : memref<128x128xbf16, #tpu.memory_space<vmem>>, vector<128x128xbf16>
    %cst_8 = arith.constant dense<0.000000e+00> : vector<8x128xf32>
    %11 = tpu.matmul %9, %10, %cst_8 {dimension_numbers = #tpu.dot_dimension_numbers<[1], [0], [0], [1], [0, 0, 1, 1], [], []>} : vector<8x128xbf16>, vector<128x128xbf16>, vector<8x128xf32> -> vector<8x128xf32>
    %c0_9 = arith.constant 0 : index
    %c0_10 = arith.constant 0 : index
    %12 = vector.load %arg5[%c0_9, %c0_10] : memref<1x128xf32, #tpu.memory_space<vmem>>, vector<1x128xf32>
    %13 = vector.broadcast %12 : vector<1x128xf32> to vector<8x128xf32>
    %14 = arith.addf %11, %13 : vector<8x128xf32>
    %cst_11 = arith.constant 0.000000e+00 : f32
    %15 = vector.broadcast %cst_11 : f32 to vector<8x128xf32>
    %16 = arith.maximumf %14, %15 : vector<8x128xf32>
    %17 = arith.truncf %16 : vector<8x128xf32> to vector<8x128xbf16>
    %c0_12 = arith.constant 0 : index
    %c0_13 = arith.constant 0 : index
    %18 = vector.load %arg6[%c0_12, %c0_13] : memref<128x8xbf16, #tpu.memory_space<vmem>>, vector<128x8xbf16>
    %cst_14 = arith.constant dense<0.000000e+00> : vector<8x8xf32>
    %19 = tpu.matmul %17, %18, %cst_14 {dimension_numbers = #tpu.dot_dimension_numbers<[1], [0], [0], [1], [0, 0, 1, 1], [], []>} : vector<8x128xbf16>, vector<128x8xbf16>, vector<8x8xf32> -> vector<8x8xf32>
    %c0_15 = arith.constant 0 : index
    %c0_16 = arith.constant 0 : index
    %20 = vector.load %arg7[%c0_15, %c0_16] : memref<1x8xf32, #tpu.memory_space<vmem>>, vector<1x8xf32>
    %21 = vector.broadcast %20 : vector<1x8xf32> to vector<8x8xf32>
    %22 = arith.addf %19, %21 : vector<8x8xf32>
    %cst_17 = arith.constant -2.000000e+01 : f32
    %cst_18 = arith.constant 2.000000e+00 : f32
    %23 = vector.broadcast %cst_17 : f32 to vector<8x8xf32>
    %24 = arith.maximumf %23, %22 : vector<8x8xf32>
    %25 = vector.broadcast %cst_18 : f32 to vector<8x8xf32>
    %26 = arith.minimumf %25, %24 : vector<8x8xf32>
    %27 = math.exp %26 : vector<8x8xf32>
    %28 = tpu.iota {dimensions = array<i32: 1>} : vector<8x8xi32>
    %c4_i32 = arith.constant 4 : i32
    %29 = vector.broadcast %c4_i32 : i32 to vector<8x8xi32>
    %30 = arith.cmpi sge, %28, %29 : vector<8x8xi32>
    %31 = arith.select %30, %27, %22 : vector<8x8xi1>, vector<8x8xf32>
    %c0_19 = arith.constant 0 : index
    %c0_20 = arith.constant 0 : index
    %32 = vector.load %arg8[%c0_19, %c0_20] : memref<8x8xf32, #tpu.memory_space<vmem>>, vector<8x8xf32>
    tpu.vector_store %arg8[%c0_19, %c0_20], %31 {strides = array<i32>} : memref<8x8xf32, #tpu.memory_space<vmem>>, vector<8x8xf32>,
    return
  }
  func.func @transform_0(%arg0: i32) -> (i32, i32) {
    %c0_i32 = arith.constant 0 : i32
    %c0_i32_0 = arith.constant 0 : i32
    return %arg0, %c0_i32 : i32, i32
  }
  func.func @transform_1(%arg0: i32) -> (i32, i32) {
    %c0_i32 = arith.constant 0 : i32
    %c0_i32_0 = arith.constant 0 : i32
    %c0_i32_1 = arith.constant 0 : i32
    return %c0_i32, %c0_i32_0 : i32, i32
  }
  func.func @transform_2(%arg0: i32) -> (i32, i32) {
    %c0_i32 = arith.constant 0 : i32
    %c0_i32_0 = arith.constant 0 : i32
    %c0_i32_1 = arith.constant 0 : i32
    return %c0_i32, %c0_i32_0 : i32, i32
  }
  func.func @transform_3(%arg0: i32) -> (i32, i32) {
    %c0_i32 = arith.constant 0 : i32
    %c0_i32_0 = arith.constant 0 : i32
    %c0_i32_1 = arith.constant 0 : i32
    return %c0_i32, %c0_i32_0 : i32, i32
  }
  func.func @transform_4(%arg0: i32) -> (i32, i32) {
    %c0_i32 = arith.constant 0 : i32
    %c0_i32_0 = arith.constant 0 : i32
    %c0_i32_1 = arith.constant 0 : i32
    return %c0_i32, %c0_i32_0 : i32, i32
  }
  func.func @transform_5(%arg0: i32) -> (i32, i32) {
    %c0_i32 = arith.constant 0 : i32
    %c0_i32_0 = arith.constant 0 : i32
    %c0_i32_1 = arith.constant 0 : i32
    return %c0_i32, %c0_i32_0 : i32, i32
  }
  func.func @transform_6(%arg0: i32) -> (i32, i32) {
    %c0_i32 = arith.constant 0 : i32
    %c0_i32_0 = arith.constant 0 : i32
    %c0_i32_1 = arith.constant 0 : i32
    return %c0_i32, %c0_i32_0 : i32, i32
  }
  func.func @transform_7(%arg0: i32) -> (i32, i32) {
    %c0_i32 = arith.constant 0 : i32
    %c0_i32_0 = arith.constant 0 : i32
    return %arg0, %c0_i32 : i32, i32
  }
}

</mosaic_0001>

<llo_original>
// kernel: tpu_custom_call.1
$region0: #{tpu_custom_call.1}
  #allocation0 [shape = 'u32[]', space=smem, size = 0x4, offset = 0x4, fixed_abs, tag = 'smem constant byte address 0x4 - core index']
  #allocation1 [shape = 'u32[144,128]{1,0:T(1,128)}', space=vmem, size = 0x12000, scoped, tag = 'internal scratch']
  %s0 = inlined_call_operand.vmem [shape: f32[2,8], index: 0, kind: input, shape index: {}]
  %s1 = inlined_call_operand.vmem [shape: bf16[8,128], index: 1, kind: input, shape index: {}]
  %s2 = inlined_call_operand.vmem [shape: f32[1,128], index: 2, kind: input, shape index: {}]
  %s3 = inlined_call_operand.vmem [shape: bf16[128,128], index: 3, kind: input, shape index: {}]
  %s4 = inlined_call_operand.vmem [shape: f32[1,128], index: 4, kind: input, shape index: {}]
  %s5 = inlined_call_operand.vmem [shape: bf16[128,8], index: 5, kind: input, shape index: {}]
  %s6 = inlined_call_operand.vmem [shape: f32[1,8], index: 6, kind: input, shape index: {}]
  %s7 = inlined_call_operand.hbm [shape: f32[2,8], index: 7, kind: output, shape index: {}]
  %s8 = sld [smem:[#allocation0]]
  $region38: #{tpu_custom_call.1} parent=0
    _
  %s10 = ssub.s32 1, %s8
  %s11 = scalar_select 0, %s10, %s8
  $region1: #{tpu_custom_call.1} parent=0
    #allocation2 [shape = 'u8[4096]{0}', space=vmem, size = 0x1000, scoped, tag = 'output window, operand 0, single buffered']
    #allocation3 [shape = 's32[1]{0}', space=sflag, size = 0x4, scoped, tag = 'scoped memory for tpu_custom_call.1']
    %12 = vsyncpa [#allocation3], 0
    // Predicated region
    $region2: #{tpu_custom_call.1} parent=1 // pred_check
      _
    $region3: #{tpu_custom_call.1} parent=1 // pred_check_branch
      %14 = sbr.rel (0) target = $region5
    $region4: #{tpu_custom_call.1} parent=1 // pred_region
      _
    $region5: #{tpu_custom_call.1} parent=1 // pred_fallthru
      _
    // Predicated region
    $region6: #{tpu_custom_call.1} parent=1 // pred_check
      _
    $region7: #{tpu_custom_call.1} parent=1 // pred_check_branch
      %16 = sbr.rel (0) target = $region9
    $region8: #{tpu_custom_call.1} parent=1 // pred_region
      _
    $region9: #{tpu_custom_call.1} parent=1 // pred_fallthru
      _
    // Predicated region
    $region10: #{tpu_custom_call.1} parent=1 // pred_check
      _
    $region11: #{tpu_custom_call.1} parent=1 // pred_check_branch
      %18 = sbr.rel (0) target = $region13
    $region12: #{tpu_custom_call.1} parent=1 // pred_region
      _
    $region13: #{tpu_custom_call.1} parent=1 // pred_fallthru
      _
    // Predicated region
    $region14: #{tpu_custom_call.1} parent=1 // pred_check
      _
    $region15: #{tpu_custom_call.1} parent=1 // pred_check_branch
      %20 = sbr.rel (0) target = $region17
    $region16: #{tpu_custom_call.1} parent=1 // pred_region
      _
    $region17: #{tpu_custom_call.1} parent=1 // pred_fallthru
      _
    // Predicated region
    $region18: #{tpu_custom_call.1} parent=1 // pred_check
      _
    $region19: #{tpu_custom_call.1} parent=1 // pred_check_branch
      %22 = sbr.rel (0) target = $region21
    $region20: #{tpu_custom_call.1} parent=1 // pred_region
      _
    $region21: #{tpu_custom_call.1} parent=1 // pred_fallthru
      _
    // Predicated region
    $region22: #{tpu_custom_call.1} parent=1 // pred_check
      _
    $region23: #{tpu_custom_call.1} parent=1 // pred_check_branch
      %24 = sbr.rel (0) target = $region25
    $region24: #{tpu_custom_call.1} parent=1 // pred_region
      _
    $region25: #{tpu_custom_call.1} parent=1 // pred_fallthru
      _
    // Predicated region
    $region26: #{tpu_custom_call.1} parent=1 // pred_check
      _
    $region27: #{tpu_custom_call.1} parent=1 // pred_check_branch
      %26 = sbr.rel (0) target = $region29
    $region28: #{tpu_custom_call.1} parent=1 // pred_region
      _
    $region29: #{tpu_custom_call.1} parent=1 // pred_fallthru
      _
    %v28 = vld [vmem:[%s0] sm:$0xff]
    %v29 = vpack.c.bf16 %v28, %v28
    %v30 = vld [vmem:[%s1] sm:$0xf]
    %v31 = vld [vmem:[%s2] sm:$0x1]
    %v33 = vlaneseq
    %v34 = vshrl.u32 %v33, 7
    %v35 = vsub.s32 0, %v34
    %v36 = vrot.slane %v31, %v35
    %vm38 = vcmask 64512
    %v40 = vsel %vm38, %v29, 0
    %vm42 = vcmask 1043456
    %v44 = vsel %vm42, %v30, 0
    %46 = vmatprep.subr.bf16.mxu0 0
    %47 = vmatpush1.bf16.msra.mxu0 %v44
    %48 = vmatprep.subr.bf16.mxu0 0
    %49 = vmatpush1.bf16.msra.mxu0 0
    %50 = vmatprep.subr.bf16.mxu0 0
    %51 = vmatpush1.bf16.msra.mxu0 0
    %52 = vmatprep.subr.bf16.mxu0 0
    %53 = vmatpush1.bf16.msra.mxu0 0
    %54 = vmatprep.subr.bf16.mxu0 0
    %55 = vmatpush1.bf16.msra.mxu0 0
    %56 = vmatprep.subr.bf16.mxu0 0
    %57 = vmatpush1.bf16.msra.mxu0 0
    %58 = vmatprep.subr.bf16.mxu0 0
    %59 = vmatpush1.bf16.msra.mxu0 0
    %60 = vmatprep.subr.bf16.mxu0 0
    %61 = vmatpush1.bf16.msra.mxu0 0
    %62 = vmatprep.subr.bf16.mxu0 0
    %63 = vmatpush1.bf16.msra.mxu0 0
    %64 = vmatprep.subr.bf16.mxu0 0
    %65 = vmatpush1.bf16.msra.mxu0 0
    %66 = vmatprep.subr.bf16.mxu0 0
    %67 = vmatpush1.bf16.msra.mxu0 0
    %68 = vmatprep.subr.bf16.mxu0 0
    %69 = vmatpush1.bf16.msra.mxu0 0
    %70 = vmatprep.subr.bf16.mxu0 0
    %71 = vmatpush1.bf16.msra.mxu0 0
    %72 = vmatprep.subr.bf16.mxu0 0
    %73 = vmatpush1.bf16.msra.mxu0 0
    %74 = vmatprep.subr.bf16.mxu0 0
    %75 = vmatpush1.bf16.msra.mxu0 0
    %76 = vmatprep.subr.bf16.mxu0 0
    %77 = vmatpush1.bf16.msra.mxu0 0
    %78 = vmatprep.mubr.bf16.mxu0 0
    %79 = vmatmul.mubr.bf16.gmra.mrb[0].mxu0 %v40
    %v80 = vpop.f32.mrb[0].mxu0
    %v81 = vadd.f32 %v36, %v80
    %v82 = vpop.f32.mrb[0].mxu0
    %v83 = vpop.f32.mrb[0].mxu0
    %v84 = vpop.f32.mrb[0].mxu0
    %85 = vdwg.mxu0
    %v86 = vmax.f32 %v81, 0.0
    %v87 = vpack.c.bf16 %v86, %v86
    %v88 = vld [vmem:[%s3] sm:$0xf]
    %v89 = vld [vmem:[%s3 + $0x4] sm:$0xf]
    %v90 = vld [vmem:[%s3 + $0x8] sm:$0xf]
    %v91 = vld [vmem:[%s3 + $0xc] sm:$0xf]
    %v92 = vld [vmem:[%s3 + $0x10] sm:$0xf]
    %v93 = vld [vmem:[%s3 + $0x14] sm:$0xf]
    %v94 = vld [vmem:[%s3 + $0x18] sm:$0xf]
    %v95 = vld [vmem:[%s3 + $0x1c] sm:$0xf]
    %v96 = vld [vmem:[%s3 + $0x20] sm:$0xf]
    %v97 = vld [vmem:[%s3 + $0x24] sm:$0xf]
    %v98 = vld [vmem:[%s3 + $0x28] sm:$0xf]
    %v99 = vld [vmem:[%s3 + $0x2c] sm:$0xf]
    %v100 = vld [vmem:[%s3 + $0x30] sm:$0xf]
    %v101 = vld [vmem:[%s3 + $0x34] sm:$0xf]
    %v102 = vld [vmem:[%s3 + $0x38] sm:$0xf]
    %v103 = vld [vmem:[%s3 + $0x3c] sm:$0xf]
    %v104 = vld [vmem:[%s4] sm:$0x1]
    %v106 = vlaneseq
    %v107 = vshrl.u32 %v106, 7
    %v108 = vsub.s32 0, %v107
    %v109 = vrot.slane %v104, %v108
    %v127 = vunpack.c.l.b16 %v88
    %v128 = vunpack.c.l.b16 %v89
    %v129 = vunpack.c.l.b16 %v90
    %v130 = vunpack.c.l.b16 %v91
    %v131 = vunpack.c.l.b16 %v92
    %v132 = vunpack.c.l.b16 %v93
    %v133 = vunpack.c.l.b16 %v94
    %v134 = vunpack.c.l.b16 %v95
    %v135 = vunpack.c.l.b16 %v96
    %v136 = vunpack.c.l.b16 %v97
    %v137 = vunpack.c.l.b16 %v98
    %v138 = vunpack.c.l.b16 %v99
    %v139 = vunpack.c.l.b16 %v100
    %v140 = vunpack.c.l.b16 %v101
    %v141 = vunpack.c.l.b16 %v102
    %v142 = vunpack.c.l.b16 %v103
    %v143 = vpack.c.b16 %v128, %v127
    %v144 = vpack.c.b16 %v130, %v129
    %v145 = vpack.c.b16 %v132, %v131
    %v146 = vpack.c.b16 %v134, %v133
    %v147 = vpack.c.b16 %v136, %v135
    %v148 = vpack.c.b16 %v138, %v137
    %v149 = vpack.c.b16 %v140, %v139
    %v150 = vpack.c.b16 %v142, %v141
    %159 = vmatprep.subr.bf16.mxu0 0
    %160 = vmatpush1.bf16.msra.mxu0 %v143
    %161 = vmatprep.subr.bf16.mxu0 0
    %162 = vmatpush1.bf16.msra.mxu0 %v144
    %163 = vmatprep.subr.bf16.mxu0 0
    %164 = vmatpush1.bf16.msra.mxu0 %v145
    %165 = vmatprep.subr.bf16.mxu0 0
    %166 = vmatpush1.bf16.msra.mxu0 %v146
    %167 = vmatprep.subr.bf16.mxu0 0
    %168 = vmatpush1.bf16.msra.mxu0 %v147
    %169 = vmatprep.subr.bf16.mxu0 0
    %170 = vmatpush1.bf16.msra.mxu0 %v148
    %171 = vmatprep.subr.bf16.mxu0 0
    %172 = vmatpush1.bf16.msra.mxu0 %v149
    %173 = vmatprep.subr.bf16.mxu0 0
    %174 = vmatpush1.bf16.msra.mxu0 %v150
    %175 = vmatprep.subr.bf16.mxu0 0
    %176 = vmatpush1.bf16.msra.mxu0 0
    %177 = vmatprep.subr.bf16.mxu0 0
    %178 = vmatpush1.bf16.msra.mxu0 0
    %179 = vmatprep.subr.bf16.mxu0 0
    %180 = vmatpush1.bf16.msra.mxu0 0
    %181 = vmatprep.subr.bf16.mxu0 0
    %182 = vmatpush1.bf16.msra.mxu0 0
    %183 = vmatprep.subr.bf16.mxu0 0
    %184 = vmatpush1.bf16.msra.mxu0 0
    %185 = vmatprep.subr.bf16.mxu0 0
    %186 = vmatpush1.bf16.msra.mxu0 0
    %187 = vmatprep.subr.bf16.mxu0 0
    %188 = vmatpush1.bf16.msra.mxu0 0
    %189 = vmatprep.subr.bf16.mxu0 0
    %190 = vmatpush1.bf16.msra.mxu0 0
    %191 = vmatprep.mubr.bf16.mxu0 0
    %192 = vmatmul.mubr.bf16.gmra.mrb[0].mxu0 %v87
    %v193 = vpop.f32.mrb[0].mxu0
    %v194 = vadd.f32 %v109, %v193
    %v195 = vpop.f32.mrb[0].mxu0
    %v196 = vpop.f32.mrb[0].mxu0
    %v197 = vpop.f32.mrb[0].mxu0
    %198 = vdwg.mxu0
    %v199 = vmax.f32 %v194, 0.0
    %v200 = vpack.c.bf16 %v199, %v199
    %v201 = vld [vmem:[%s5] sm:$0xf]
    %v202 = vld [vmem:[%s5 + $0x4] sm:$0xf]
    %v203 = vld [vmem:[%s5 + $0x8] sm:$0xf]
    %v204 = vld [vmem:[%s5 + $0xc] sm:$0xf]
    %v205 = vld [vmem:[%s5 + $0x10] sm:$0xf]
    %v206 = vld [vmem:[%s5 + $0x14] sm:$0xf]
    %v207 = vld [vmem:[%s5 + $0x18] sm:$0xf]
    %v208 = vld [vmem:[%s5 + $0x1c] sm:$0xf]
    %v209 = vld [vmem:[%s5 + $0x20] sm:$0xf]
    %v210 = vld [vmem:[%s5 + $0x24] sm:$0xf]
    %v211 = vld [vmem:[%s5 + $0x28] sm:$0xf]
    %v212 = vld [vmem:[%s5 + $0x2c] sm:$0xf]
    %v213 = vld [vmem:[%s5 + $0x30] sm:$0xf]
    %v214 = vld [vmem:[%s5 + $0x34] sm:$0xf]
    %v215 = vld [vmem:[%s5 + $0x38] sm:$0xf]
    %v216 = vld [vmem:[%s5 + $0x3c] sm:$0xf]
    %v217 = vld [vmem:[%s6] sm:$0x1]
    %v219 = vlaneseq
    %v220 = vshrl.u32 %v219, 7
    %v221 = vsub.s32 0, %v220
    %v222 = vrot.slane %v217, %v221
    %v240 = vunpack.c.l.b16 %v201
    %v241 = vunpack.c.l.b16 %v202
    %v242 = vunpack.c.l.b16 %v203
    %v243 = vunpack.c.l.b16 %v204
    %v244 = vunpack.c.l.b16 %v205
    %v245 = vunpack.c.l.b16 %v206
    %v246 = vunpack.c.l.b16 %v207
    %v247 = vunpack.c.l.b16 %v208
    %v248 = vunpack.c.l.b16 %v209
    %v249 = vunpack.c.l.b16 %v210
    %v250 = vunpack.c.l.b16 %v211
    %v251 = vunpack.c.l.b16 %v212
    %v252 = vunpack.c.l.b16 %v213
    %v253 = vunpack.c.l.b16 %v214
    %v254 = vunpack.c.l.b16 %v215
    %v255 = vunpack.c.l.b16 %v216
    %v256 = vpack.c.b16 %v241, %v240
    %v257 = vpack.c.b16 %v243, %v242
    %v258 = vpack.c.b16 %v245, %v244
    %v259 = vpack.c.b16 %v247, %v246
    %v260 = vpack.c.b16 %v249, %v248
    %v261 = vpack.c.b16 %v251, %v250
    %v262 = vpack.c.b16 %v253, %v252
    %v263 = vpack.c.b16 %v255, %v254
    %272 = vmatprep.subr.bf16.mxu0 0
    %273 = vmatpush1.bf16.msra.mxu0 %v256
    %274 = vmatprep.subr.bf16.mxu0 0
    %275 = vmatpush1.bf16.msra.mxu0 %v257
    %276 = vmatprep.subr.bf16.mxu0 0
    %277 = vmatpush1.bf16.msra.mxu0 %v258
    %278 = vmatprep.subr.bf16.mxu0 0
    %279 = vmatpush1.bf16.msra.mxu0 %v259
    %280 = vmatprep.subr.bf16.mxu0 0
    %281 = vmatpush1.bf16.msra.mxu0 %v260
    %282 = vmatprep.subr.bf16.mxu0 0
    %283 = vmatpush1.bf16.msra.mxu0 %v261
    %284 = vmatprep.subr.bf16.mxu0 0
    %285 = vmatpush1.bf16.msra.mxu0 %v262
    %286 = vmatprep.subr.bf16.mxu0 0
    %287 = vmatpush1.bf16.msra.mxu0 %v263
    %288 = vmatprep.subr.bf16.mxu0 0
    %289 = vmatpush1.bf16.msra.mxu0 0
    %290 = vmatprep.subr.bf16.mxu0 0
    %291 = vmatpush1.bf16.msra.mxu0 0
    %292 = vmatprep.subr.bf16.mxu0 0
    %293 = vmatpush1.bf16.msra.mxu0 0
    %294 = vmatprep.subr.bf16.mxu0 0
    %295 = vmatpush1.bf16.msra.mxu0 0
    %296 = vmatprep.subr.bf16.mxu0 0
    %297 = vmatpush1.bf16.msra.mxu0 0
    %298 = vmatprep.subr.bf16.mxu0 0
    %299 = vmatpush1.bf16.msra.mxu0 0
    %300 = vmatprep.subr.bf16.mxu0 0
    %301 = vmatpush1.bf16.msra.mxu0 0
    %302 = vmatprep.subr.bf16.mxu0 0
    %303 = vmatpush1.bf16.msra.mxu0 0
    %304 = vmatprep.mubr.bf16.mxu0 0
    %305 = vmatmul.mubr.bf16.gmra.mrb[0].mxu0 %v200
    %v306 = vpop.f32.mrb[0].mxu0
    %v307 = vadd.f32 %v222, %v306
    %v308 = vpop.f32.mrb[0].mxu0
    %v309 = vpop.f32.mrb[0].mxu0
    %v310 = vpop.f32.mrb[0].mxu0
    %311 = vdwg.mxu0
    %v312 = vmax.f32 %v307, -20.0
    %v313 = vmin.f32 %v312, 2.0
    %v314 = vmul.f32 %v313, 1.442695
    %v315 = vpow.pop %v314
    %v316 = vlaneseq
    %v317 = vand.u32 %v316, 127
    %vm318 = vcmp.ge.s32.totalorder %v317, 4
    %v319 = vsel %vm318, %v315, %v307
    %320 = vst.msk [vmem:[#allocation2] sm:$0xff] %vm38, %v319
    // Predicated region
    $region30: #{tpu_custom_call.1} parent=1 // pred_check
      _
    $region31: #{tpu_custom_call.1} parent=1 // pred_check_branch
      %322 = sbr.rel (0) target = $region33
    $region32: #{tpu_custom_call.1} parent=1 // pred_region
      %s324 = ssub.s32 128, 32
      %325 = vsyncadd [#allocation3], %s324
      %s326 = sshll.u32 [#allocation2], 4
      %s327 = int_to_ptr.vmem [resolvable:$true] %s326
      %332 = dma.vmem_to_hbm [thread:$0]  %s327, 32, %s7, [#allocation3], 32, 32, 2
    $region33: #{tpu_custom_call.1} parent=1 // pred_fallthru
      _
    // Predicated region
    $region34: #{tpu_custom_call.1} parent=1 // pred_check
      _
    $region35: #{tpu_custom_call.1} parent=1 // pred_check_branch
      %334 = sbr.rel (0) target = $region37
    $region36: #{tpu_custom_call.1} parent=1 // pred_region
      %335 = dma.done [#allocation3], 128
    $region37: #{tpu_custom_call.1} parent=1 // pred_fallthru
      _
    %336 = vsyncpa [#allocation3], 1

</llo_original>
